<compile_context>
chip_gen: v6e
topology: v6e:2x2x1
jax: 0.10.0
libtpu: 0.0.40
codegen_flags: <defaults>
</compile_context>

<pallas_src>
import jax
import jax.numpy as jnp
from jax import lax
from jax.experimental import pallas as pl
from jax.experimental.pallas import tpu as pltpu


def _fused_generator_kernel(x_ref, w_ref, b_ref, o_ref):
    # One MXU matmul (bf16 or f32 operands, f32 accumulation), bias add on the VPU,
    # tanh on the EUP, cast back to the output dtype.
    h = jnp.dot(x_ref[...], w_ref[...], preferred_element_type=jnp.float32)
    h = h + b_ref[...].astype(jnp.float32)
    o_ref[...] = jnp.tanh(h).astype(o_ref.dtype)


def generator_x_pallas(x, w1, w2, w3, w4, b4, *,
                       compute_dtype=jnp.bfloat16, max_batch_tile=256):
    """GeneratorX forward: tanh((((x@w1)@w2)@w3)@w4 + b4).

    x: (B, zd). Weights are (in_features, out_features). b4: (xd,).
    The weight chain is folded once (f32, outside the kernel) into W_eff (zd, xd);
    the kernel computes tanh(x @ W_eff + b4) on the MXU in one (or a few) grid steps.
    """
    B, zd = x.shape
    xd = w4.shape[1]

    # Pre-fold the weights in f32 at full precision (done once, outside the kernel;
    # cost is negligible next to the batched matmul).
    hp = lax.Precision.HIGHEST
    w_eff = jnp.dot(
        jnp.dot(jnp.dot(w1.astype(jnp.float32), w2.astype(jnp.float32), precision=hp),
                w3.astype(jnp.float32), precision=hp),
        w4.astype(jnp.float32), precision=hp)

    # MXU operands in compute_dtype (bf16 default), f32 accumulation in-kernel.
    x_in = x.astype(compute_dtype)
    w_in = w_eff.astype(compute_dtype)
    b_in = b4.reshape(1, xd).astype(jnp.float32)

    # Single grid step for small batches; tile only when the batch is large.
    tb = B if B <= max_batch_tile else max_batch_tile
    pad = (-B) % tb
    if pad:
        x_in = jnp.pad(x_in, ((0, pad), (0, 0)))
    Bp = B + pad
    n_steps = Bp // tb

    out = pl.pallas_call(
        _fused_generator_kernel,
        out_shape=jax.ShapeDtypeStruct((Bp, xd), x.dtype),
        grid_spec=pltpu.PrefetchScalarGridSpec(
            num_scalar_prefetch=0,
            grid=(n_steps,),
            in_specs=[
                pl.BlockSpec((tb, zd), lambda i: (i, 0)),   # x batch tile
                pl.BlockSpec((zd, xd), lambda i: (0, 0)),   # folded weight (resident)
                pl.BlockSpec((1, xd), lambda i: (0, 0)),    # bias (resident)
            ],
            out_specs=pl.BlockSpec((tb, xd), lambda i: (i, 0)),
        ),
        compiler_params=pltpu.CompilerParams(
            dimension_semantics=(("parallel",) if n_steps > 1 else ("arbitrary",)),
        ),
    )(x_in, w_in, b_in)

    return out[:B] if pad else out


def init_params(key, zd=16, xd=256, dtype=jnp.float32):
    """Deterministic init mimicking PyTorch nn.Linear default (uniform +/- 1/sqrt(fan_in)).

    Returns weights already transposed to (in_features, out_features)."""
    dims = [zd, 4 * zd, 8 * zd, 16 * zd, xd]
    keys = jax.random.split(key, 5)
    ws = []
    for li in range(4):
        fan_in, fan_out = dims[li], dims[li + 1]
        bound = 1.0 / (fan_in ** 0.5)
        ws.append(jax.random.uniform(keys[li], (fan_in, fan_out), dtype=dtype,
                                     minval=-bound, maxval=bound))
    bound = 1.0 / (dims[3] ** 0.5)  # bias only on the last layer
    b4 = jax.random.uniform(keys[4], (xd,), dtype=dtype, minval=-bound, maxval=bound)
    return ws[0], ws[1], ws[2], ws[3], b4


def generator_x_ref(x, w1, w2, w3, w4, b4):
    hp = lax.Precision.HIGHEST
    h = jnp.dot(x, w1, precision=hp)
    h = jnp.dot(h, w2, precision=hp)
    h = jnp.dot(h, w3, precision=hp)
    h = jnp.dot(h, w4, precision=hp) + b4
    return jnp.tanh(h)


if __name__ == "__main__":
    zd, xd = 16, 256
    B = 16

    key = jax.random.PRNGKey(0)
    kx, kp = jax.random.split(key)
    x = jax.random.normal(kx, (B, zd), dtype=jnp.float32)
    w1, w2, w3, w4, b4 = init_params(kp, zd=zd, xd=xd)

    ref = generator_x_ref(x, w1, w2, w3, w4, b4)

    # f32 operands: near-exact agreement with the unfused reference (only the
    # fold's rounding order differs).
    out_f32 = jax.block_until_ready(
        generator_x_pallas(x, w1, w2, w3, w4, b4, compute_dtype=jnp.float32))
    assert out_f32.shape == (B, xd)
    assert jnp.allclose(out_f32, ref, atol=1e-3, rtol=1e-3), "f32 mismatch vs reference"

    # Default path: bf16 MXU operands with f32 accumulation (looser tolerance).
    out = jax.block_until_ready(generator_x_pallas(x, w1, w2, w3, w4, b4))
    assert out.shape == (B, xd)
    assert jnp.allclose(out, ref, atol=2e-2, rtol=2e-2), "bf16 mismatch vs reference"

    print("KERNEL_OK")
</pallas_src>

<mosaic_0001>
module attributes {stable_mosaic.version = 11 : i64} {
  func.func @_fused_generator_kernel(%arg0: i32, %arg1: memref<16x16xf32, #tpu.memory_space<vmem>>, %arg2: memref<16x256xf32, #tpu.memory_space<vmem>>, %arg3: memref<1x256xf32, #tpu.memory_space<vmem>>, %arg4: memref<16x256xf32, #tpu.memory_space<vmem>>) attributes {dimension_semantics = [#tpu.dimension_semantics<arbitrary>], iteration_bounds = array<i64: 1>, scalar_prefetch = 0 : i64, scratch_operands = 0 : i64, tpu.core_type = #tpu.core_type<tc>, window_params = [{transform_indices = @transform_0, window_bounds = array<i64: 16, 16>}, {pipeline_mode = #tpu.pipeline_mode<synchronous>, transform_indices = @transform_1, window_bounds = array<i64: 16, 256>}, {pipeline_mode = #tpu.pipeline_mode<synchronous>, transform_indices = @transform_2, window_bounds = array<i64: 1, 256>}, {transform_indices = @transform_3, window_bounds = array<i64: 16, 256>}]} {
    %c0 = arith.constant 0 : index
    %c0_0 = arith.constant 0 : index
    %0 = vector.load %arg1[%c0, %c0_0] : memref<16x16xf32, #tpu.memory_space<vmem>>, vector<16x16xf32>
    %c0_1 = arith.constant 0 : index
    %c0_2 = arith.constant 0 : index
    %1 = vector.load %arg2[%c0_1, %c0_2] : memref<16x256xf32, #tpu.memory_space<vmem>>, vector<16x256xf32>
    %cst = arith.constant dense<0.000000e+00> : vector<16x256xf32>
    %2 = tpu.matmul %0, %1, %cst {dimension_numbers = #tpu.dot_dimension_numbers<[1], [0], [0], [1], [0, 0, 1, 1], [], []>} : vector<16x16xf32>, vector<16x256xf32>, vector<16x256xf32> -> vector<16x256xf32>
    %c0_3 = arith.constant 0 : index
    %c0_4 = arith.constant 0 : index
    %3 = vector.load %arg3[%c0_3, %c0_4] : memref<1x256xf32, #tpu.memory_space<vmem>>, vector<1x256xf32>
    %4 = vector.broadcast %3 : vector<1x256xf32> to vector<16x256xf32>
    %5 = arith.addf %2, %4 : vector<16x256xf32>
    %6 = math.tanh %5 : vector<16x256xf32>
    %c0_5 = arith.constant 0 : index
    %c0_6 = arith.constant 0 : index
    %7 = vector.load %arg4[%c0_5, %c0_6] : memref<16x256xf32, #tpu.memory_space<vmem>>, vector<16x256xf32>
    tpu.vector_store %arg4[%c0_5, %c0_6], %6 {strides = array<i32>} : memref<16x256xf32, #tpu.memory_space<vmem>>, vector<16x256xf32>,
    return
  }
  func.func @transform_0(%arg0: i32) -> (i32, i32) {
    %c0_i32 = arith.constant 0 : i32
    %c0_i32_0 = arith.constant 0 : i32
    return %arg0, %c0_i32 : i32, i32
  }
  func.func @transform_1(%arg0: i32) -> (i32, i32) {
    %c0_i32 = arith.constant 0 : i32
    %c0_i32_0 = arith.constant 0 : i32
    %c0_i32_1 = arith.constant 0 : i32
    return %c0_i32, %c0_i32_0 : i32, i32
  }
  func.func @transform_2(%arg0: i32) -> (i32, i32) {
    %c0_i32 = arith.constant 0 : i32
    %c0_i32_0 = arith.constant 0 : i32
    %c0_i32_1 = arith.constant 0 : i32
    return %c0_i32, %c0_i32_0 : i32, i32
  }
  func.func @transform_3(%arg0: i32) -> (i32, i32) {
    %c0_i32 = arith.constant 0 : i32
    %c0_i32_0 = arith.constant 0 : i32
    return %arg0, %c0_i32 : i32, i32
  }
}

</mosaic_0001>

<llo_original>
// kernel: tpu_custom_call.1
$region0: #{tpu_custom_call.1}
  #allocation0 [shape = 'u32[]', space=smem, size = 0x4, offset = 0x4, fixed_abs, tag = 'smem constant byte address 0x4 - core index']
  #allocation1 [shape = 'u32[144,128]{1,0:T(1,128)}', space=vmem, size = 0x12000, scoped, tag = 'internal scratch']
  %s0 = inlined_call_operand.hbm [shape: f32[16,16], index: 0, kind: input, shape index: {}]
  %s1 = inlined_call_operand.hbm [shape: f32[16,256], index: 1, kind: input, shape index: {}]
  %s2 = inlined_call_operand.vmem [shape: f32[1,256], index: 2, kind: input, shape index: {}]
  %s3 = inlined_call_operand.hbm [shape: f32[16,256], index: 3, kind: output, shape index: {}]
  %s4 = sld [smem:[#allocation0]]
  $region30: #{tpu_custom_call.1} parent=0
    _
  %s6 = ssub.s32 1, %s4
  %s7 = scalar_select 0, %s6, %s4
  $region1: #{tpu_custom_call.1} parent=0
    #allocation2 [shape = 'u8[8192]{0}', space=vmem, size = 0x2000, scoped, tag = 'input window, operand 0, single buffered']
    #allocation3 [shape = 's32[1]{0}', space=sflag, size = 0x4, scoped, tag = 'scoped memory for tpu_custom_call.1']
    #allocation4 [shape = 's32[1]{0}', space=sflag, size = 0x4, scoped, tag = 'scoped memory for tpu_custom_call.1']
    #allocation5 [shape = 'u8[16384]{0}', space=vmem, size = 0x4000, scoped, tag = 'input window, operand 1, single buffered']
    #allocation6 [shape = 's32[1]{0}', space=sflag, size = 0x4, scoped, tag = 'scoped memory for tpu_custom_call.1']
    #allocation7 [shape = 'u8[16384]{0}', space=vmem, size = 0x4000, scoped, tag = 'output window, operand 0, single buffered']
    %8 = vsyncpa [#allocation3], 0
    %9 = vsyncpa [#allocation6], 0
    %10 = vsyncpa [#allocation4], 0
    // Predicated region
    $region2: #{tpu_custom_call.1} parent=1 // pred_check
      _
    $region3: #{tpu_custom_call.1} parent=1 // pred_check_branch
      %12 = sbr.rel (0) target = $region5
    $region4: #{tpu_custom_call.1} parent=1 // pred_region
      %s14 = ssub.s32 256, 256
      %15 = vsyncadd [#allocation3], %s14
      %s16 = sshll.u32 [#allocation2], 4
      %s17 = int_to_ptr.vmem [resolvable:$true] %s16
      %22 = dma.hbm_to_vmem [thread:$0]  %s0, 256, %s17, [#allocation3], 128, 128, 8
    $region5: #{tpu_custom_call.1} parent=1 // pred_fallthru
      _
    // Predicated region
    $region6: #{tpu_custom_call.1} parent=1 // pred_check
      _
    $region7: #{tpu_custom_call.1} parent=1 // pred_check_branch
      %24 = sbr.rel (0) target = $region9
    $region8: #{tpu_custom_call.1} parent=1 // pred_region
      %s26 = ssub.s32 512, 512
      %27 = vsyncadd [#allocation6], %s26
      %s28 = sshll.u32 [#allocation5], 4
      %s29 = int_to_ptr.vmem [resolvable:$true] %s28
      %34 = dma.hbm_to_vmem [thread:$0]  %s1, 512, %s29, [#allocation6], 256, 256, 16
    $region9: #{tpu_custom_call.1} parent=1 // pred_fallthru
      _
    // Predicated region
    $region10: #{tpu_custom_call.1} parent=1 // pred_check
      _
    $region11: #{tpu_custom_call.1} parent=1 // pred_check_branch
      %36 = sbr.rel (0) target = $region13
    $region12: #{tpu_custom_call.1} parent=1 // pred_region
      _
    $region13: #{tpu_custom_call.1} parent=1 // pred_fallthru
      _
    // Predicated region
    $region14: #{tpu_custom_call.1} parent=1 // pred_check
      _
    $region15: #{tpu_custom_call.1} parent=1 // pred_check_branch
      %38 = sbr.rel (0) target = $region17
    $region16: #{tpu_custom_call.1} parent=1 // pred_region
      %39 = dma.done [#allocation3], 256
    $region17: #{tpu_custom_call.1} parent=1 // pred_fallthru
      _
    // Predicated region
    $region18: #{tpu_custom_call.1} parent=1 // pred_check
      _
    $region19: #{tpu_custom_call.1} parent=1 // pred_check_branch
      %41 = sbr.rel (0) target = $region21
    $region20: #{tpu_custom_call.1} parent=1 // pred_region
      %42 = dma.done [#allocation6], 512
    $region21: #{tpu_custom_call.1} parent=1 // pred_fallthru
      _
    %v43 = vld [vmem:[#allocation2] sm:$0xff]
    %v44 = vld [vmem:[#allocation2 + $0x8] sm:$0xff]
    %v45 = vld [vmem:[#allocation5] sm:$0xff]
    %v46 = vld [vmem:[#allocation5 + $0x8] sm:$0xff]
    %v47 = vld [vmem:[#allocation5 + $0x10] sm:$0xff]
    %v48 = vld [vmem:[#allocation5 + $0x18] sm:$0xff]
    %v49 = vld [vmem:[%s2] sm:$0x3]
    %v51 = vlaneseq
    %v52 = vshrl.u32 %v51, 7
    %v53 = vsub.s32 0, %v52
    %v54 = vrot.slane %v49, %v53
    %v55 = vlaneseq
    %v56 = vshrl.u32 %v55, 7
    %v57 = vsub.s32 1, %v56
    %v58 = vrot.slane %v49, %v57
    %vm61 = vcmask 130048
    %v63 = vsel %vm61, %v43, 0
    %v66 = vsel %vm61, %v44, 0
    %68 = vmatprep.subr.mxu0 0.0
    %69 = vmatpush1.msra.mxu0 0.0
    %70 = vmatprep.subr.mxu0 0.0
    %71 = vmatpush1.msra.mxu0 0.0
    %72 = vmatprep.subr.mxu0 0.0
    %73 = vmatpush1.msra.mxu0 0.0
    %74 = vmatprep.subr.mxu0 0.0
    %75 = vmatpush1.msra.mxu0 0.0
    %76 = vmatprep.subr.mxu0 0.0
    %77 = vmatpush1.msra.mxu0 0.0
    %78 = vmatprep.subr.mxu0 0.0
    %79 = vmatpush1.msra.mxu0 0.0
    %80 = vmatprep.subr.mxu0 0.0
    %81 = vmatpush1.msra.mxu0 0.0
    %82 = vmatprep.subr.mxu0 0.0
    %83 = vmatpush1.msra.mxu0 0.0
    %84 = vmatprep.subr.mxu0 0.0
    %85 = vmatpush1.msra.mxu0 0.0
    %86 = vmatprep.subr.mxu0 0.0
    %87 = vmatpush1.msra.mxu0 0.0
    %88 = vmatprep.subr.mxu0 0.0
    %89 = vmatpush1.msra.mxu0 0.0
    %90 = vmatprep.subr.mxu0 0.0
    %91 = vmatpush1.msra.mxu0 0.0
    %92 = vmatprep.subr.mxu0 0.0
    %93 = vmatpush1.msra.mxu0 0.0
    %94 = vmatprep.subr.mxu0 0.0
    %95 = vmatpush1.msra.mxu0 0.0
    %96 = vmatprep.subr.mxu0 %v48
    %97 = vmatpush1.msra.mxu0 %v47
    %98 = vmatprep.subr.mxu0 %v46
    %99 = vmatpush1.msra.mxu0 %v45
    %100 = vmatprep.subr.mxu0 0.0
    %101 = vmatpush2.msra.mxu0 0.0
    %102 = vmatprep.subr.mxu0 0.0
    %103 = vmatpush2.msra.mxu0 0.0
    %104 = vmatprep.subr.mxu0 0.0
    %105 = vmatpush2.msra.mxu0 0.0
    %106 = vmatprep.subr.mxu0 0.0
    %107 = vmatpush2.msra.mxu0 0.0
    %108 = vmatprep.subr.mxu0 0.0
    %109 = vmatpush2.msra.mxu0 0.0
    %110 = vmatprep.subr.mxu0 0.0
    %111 = vmatpush2.msra.mxu0 0.0
    %112 = vmatprep.subr.mxu0 0.0
    %113 = vmatpush2.msra.mxu0 0.0
    %114 = vmatprep.subr.mxu0 0.0
    %115 = vmatpush2.msra.mxu0 0.0
    %116 = vmatprep.subr.mxu0 0.0
    %117 = vmatpush2.msra.mxu0 0.0
    %118 = vmatprep.subr.mxu0 0.0
    %119 = vmatpush2.msra.mxu0 0.0
    %120 = vmatprep.subr.mxu0 0.0
    %121 = vmatpush2.msra.mxu0 0.0
    %122 = vmatprep.subr.mxu0 0.0
    %123 = vmatpush2.msra.mxu0 0.0
    %124 = vmatprep.subr.mxu0 0.0
    %125 = vmatpush2.msra.mxu0 0.0
    %126 = vmatprep.subr.mxu0 0.0
    %127 = vmatpush2.msra.mxu0 0.0
    %128 = vmatprep.subr.mxu0 0.0
    %129 = vmatpush2.msra.mxu0 0.0
    %130 = vmatprep.subr.mxu0 0.0
    %131 = vmatpush2.msra.mxu0 0.0
    %132 = vmatprep.mubr.f32.mxu0 0.0
    %133 = vmatmul.mubr.f32.gmra.mxu0 %v63
    %v134 = vpop.f32.mrf.mxu0
    %v135 = vadd.f32 %v54, %v134
    %v136 = vpop.f32.mrf.mxu0
    %v137 = vadd.f32 %v58, %v136
    %138 = vmatprep.mubr.f32.mxu0 0.0
    %139 = vmatmul.mubr.f32.gmra.mxu0 %v66
    %v140 = vpop.f32.mrf.mxu0
    %v141 = vadd.f32 %v54, %v140
    %v142 = vpop.f32.mrf.mxu0
    %v143 = vadd.f32 %v58, %v142
    %144 = vdwg.mxu0
    %v145 = vtanh.pop %v135
    %v146 = vtanh.pop %v137
    %v147 = vtanh.pop %v141
    %v148 = vtanh.pop %v143
    %149 = vst [vmem:[#allocation7] sm:$0xff] %v145
    %150 = vst [vmem:[#allocation7 + $0x8] sm:$0xff] %v146
    %151 = vst [vmem:[#allocation7 + $0x10] sm:$0xff] %v147
    %152 = vst [vmem:[#allocation7 + $0x18] sm:$0xff] %v148
    // Predicated region
    $region22: #{tpu_custom_call.1} parent=1 // pred_check
      _
    $region23: #{tpu_custom_call.1} parent=1 // pred_check_branch
      %154 = sbr.rel (0) target = $region25
    $region24: #{tpu_custom_call.1} parent=1 // pred_region
      %s156 = ssub.s32 512, 512
      %157 = vsyncadd [#allocation4], %s156
      %s158 = sshll.u32 [#allocation7], 4
      %s159 = int_to_ptr.vmem [resolvable:$true] %s158
      %164 = dma.vmem_to_hbm [thread:$0]  %s159, 512, %s3, [#allocation4], 256, 256, 16
    $region25: #{tpu_custom_call.1} parent=1 // pred_fallthru
      _
    // Predicated region
    $region26: #{tpu_custom_call.1} parent=1 // pred_check
      _
    $region27: #{tpu_custom_call.1} parent=1 // pred_check_branch
      %166 = sbr.rel (0) target = $region29
    $region28: #{tpu_custom_call.1} parent=1 // pred_region
      %167 = dma.done [#allocation4], 512
    $region29: #{tpu_custom_call.1} parent=1 // pred_fallthru
      _
    %168 = vsyncpa [#allocation3], 1
    %169 = vsyncpa [#allocation6], 1
    %170 = vsyncpa [#allocation4], 1

</llo_original>
